<compile_context>
chip_gen: v7x
topology: tpu7x:2x2x1
jax: 0.10.0
libtpu: 0.0.40
codegen_flags: <defaults>
</compile_context>

<pallas_src>
import math
from functools import partial

import jax
import jax.numpy as jnp
from jax.experimental import pallas as pl
from jax.experimental.pallas import tpu as pltpu

# ----------------------------- configuration --------------------------------
B = 2              # batch
C = 3              # channels
H = W = 16         # spatial
D_IN = C * H * W   # 768  (multiple of 128 -> lane aligned already)
HID = 64           # logical hidden width of the stand-in backbone
N_OUT = 63         # 21 joints x 3 coords

BM_SUB = 16                                    # bf16 sublane quantum
B_PAD = ((B + BM_SUB - 1) // BM_SUB) * BM_SUB  # 16: full bf16 vreg rows
HID_PAD = 128                                  # lane-aligned hidden (zero-padded)
N_PAD = 128                                    # lane-dense output (zero-padded)
BM_TILE = 256                                  # batch tile used only when B_PAD >= 2 tiles

WING_W = 10.0      # wing-loss omega
WING_E = 2.0       # wing-loss epsilon
WING_C = WING_W - WING_W * math.log(1.0 + WING_W / WING_E)

# advisory cost numbers for XLA's scheduler
_MLP_FLOPS = 2 * B_PAD * (D_IN * HID_PAD + HID_PAD * N_PAD)
_WEIGHT_BYTES = (D_IN * HID_PAD + HID_PAD * N_PAD) * 2 + (HID_PAD + N_PAD) * 4
_X_BYTES = B_PAD * D_IN * 2
_OUT_BYTES = B_PAD * N_PAD * 4
_TGT_BYTES = B_PAD * N_PAD * 4


# ----------------------------- Pallas kernels --------------------------------
def _mlp(x_ref, w1_ref, b1_ref, w2_ref, b2_ref):
    # bf16 MXU path with f32 accumulation; all elementwise math stays f32
    # (v5e has no bf16 VPU/EUP).
    h = jnp.dot(x_ref[...], w1_ref[...], preferred_element_type=jnp.float32)
    h = jnp.maximum(h + b1_ref[...], 0.0)                       # ReLU on VPU (f32)
    out = jnp.dot(h.astype(jnp.bfloat16), w2_ref[...],
                  preferred_element_type=jnp.float32)
    return out + b2_ref[...]


def backbone_kernel(x_ref, w1_ref, b1_ref, w2_ref, b2_ref, o_ref):
    # One batch tile (or the whole padded batch) -> lane-dense (bm, N_PAD) tile.
    o_ref[...] = _mlp(x_ref, w1_ref, b1_ref, w2_ref, b2_ref).astype(o_ref.dtype)


def fused_train_kernel(x_ref, w1_ref, b1_ref, w2_ref, b2_ref, tgt_ref, loss_ref):
    # MLP + total wing loss fused: scalar loss written directly to SMEM.
    out = _mlp(x_ref, w1_ref, b1_ref, w2_ref, b2_ref)
    diff = jnp.abs(out - tgt_ref[...])
    wing = jnp.where(diff < WING_W,
                     WING_W * jnp.log(1.0 + diff / WING_E),   # EUP log (f32)
                     diff - WING_C)
    # Mask out padded batch rows and padded output columns before reducing.
    row = jax.lax.broadcasted_iota(jnp.int32, (B_PAD, N_PAD), 0)
    col = jax.lax.broadcasted_iota(jnp.int32, (B_PAD, N_PAD), 1)
    valid = (row < B) & (col < N_OUT)
    # Explicit sum * static reciprocal (no runtime divide after the reduce).
    loss_ref[0, 0] = jnp.sum(jnp.where(valid, wing, 0.0)) * (1.0 / (B * N_OUT))
    # TODO(synk): if the real backbone weights grow beyond a few MiB, split
    # D_IN over a grid axis with an f32 VMEM accumulator (pl.when init/finalize)
    # so weight DMA pipelines against the MXU.


# ----------------------------- wrappers ---------------------------------------
def _full_spec(shape):
    return pl.BlockSpec(shape, lambda: tuple(0 for _ in shape))


def _pad_to(x, shape):
    return jnp.pad(x, [(0, s - d) for d, s in zip(x.shape, shape)])


def pad_params(params):
    """Zero-pad logical (D_IN,64)/(64,63) params to lane-aligned bf16 slabs.

    Zero padding is exact: padded hidden units are relu(0)=0 and padded output
    columns stay 0, so the sliced result matches the unpadded computation.
    """
    w1, b1, w2, b2 = params
    w1p = _pad_to(w1, (D_IN, HID_PAD)).astype(jnp.bfloat16)
    b1p = _pad_to(b1, (1, HID_PAD)).astype(jnp.float32)
    w2p = _pad_to(w2, (HID_PAD, N_PAD)).astype(jnp.bfloat16)
    b2p = _pad_to(b2, (1, N_PAD)).astype(jnp.float32)
    return (w1p, b1p, w2p, b2p)


def _prep_inputs(x_img):
    # glue (fused under jit): flatten NCHW -> (B, D_IN), pad batch to the bf16
    # sublane quantum (16), cast bf16.
    x = x_img.reshape(x_img.shape[0], -1)
    return _pad_to(x, (B_PAD, D_IN)).astype(jnp.bfloat16)


def backbone_net(x_img, params_p):
    """x_img: (B, C, H, W) -> (B, 63) float32 (test path)."""
    x = _prep_inputs(x_img)
    w1, b1, w2, b2 = params_p
    b_pad = x.shape[0]
    cost = pl.CostEstimate(flops=_MLP_FLOPS, transcendentals=0,
                           bytes_accessed=_X_BYTES + _WEIGHT_BYTES + _OUT_BYTES)
    if b_pad <= BM_TILE:
        # Single tile: no grid, no dead pipeline machinery for grid-invariant
        # weights (the common path at this batch size).
        out = pl.pallas_call(
            backbone_kernel,
            out_shape=jax.ShapeDtypeStruct((b_pad, N_PAD), jnp.float32),
            grid=(),
            in_specs=[
                _full_spec((b_pad, D_IN)),
                _full_spec((D_IN, HID_PAD)),
                _full_spec((1, HID_PAD)),
                _full_spec((HID_PAD, N_PAD)),
                _full_spec((1, N_PAD)),
            ],
            out_specs=_full_spec((b_pad, N_PAD)),
            cost_estimate=cost,
        )(x, w1, b1, w2, b2)
    else:
        # Large-batch path: >=2 batch tiles, "parallel" shards across v7x's
        # two TensorCores; weights are grid-invariant blocks.
        n_btiles = pl.cdiv(b_pad, BM_TILE)
        out = pl.pallas_call(
            backbone_kernel,
            out_shape=jax.ShapeDtypeStruct((b_pad, N_PAD), jnp.float32),
            grid=(n_btiles,),
            in_specs=[
                pl.BlockSpec((BM_TILE, D_IN), lambda i: (i, 0)),
                pl.BlockSpec((D_IN, HID_PAD), lambda i: (0, 0)),
                pl.BlockSpec((1, HID_PAD), lambda i: (0, 0)),
                pl.BlockSpec((HID_PAD, N_PAD), lambda i: (0, 0)),
                pl.BlockSpec((1, N_PAD), lambda i: (0, 0)),
            ],
            out_specs=pl.BlockSpec((BM_TILE, N_PAD), lambda i: (i, 0)),
            compiler_params=pltpu.CompilerParams(
                dimension_semantics=("parallel",)),
            cost_estimate=cost,
        )(x, w1, b1, w2, b2)
    return out[:B, :N_OUT]    # slice off padded rows/lanes (fused under jit)


def total_wing_loss_fused(x_img, targets_2d, params_p):
    """Fused backbone + total wing loss -> scalar float32 (train path)."""
    x = _prep_inputs(x_img)
    t = _pad_to(targets_2d.astype(jnp.float32), (B_PAD, N_PAD))
    w1, b1, w2, b2 = params_p
    loss = pl.pallas_call(
        fused_train_kernel,
        out_shape=jax.ShapeDtypeStruct((1, 1), jnp.float32),
        grid=(),
        in_specs=[
            _full_spec((B_PAD, D_IN)),
            _full_spec((D_IN, HID_PAD)),
            _full_spec((1, HID_PAD)),
            _full_spec((HID_PAD, N_PAD)),
            _full_spec((1, N_PAD)),
            _full_spec((B_PAD, N_PAD)),
        ],
        out_specs=pl.BlockSpec(memory_space=pltpu.MemorySpace.SMEM),
        cost_estimate=pl.CostEstimate(
            flops=_MLP_FLOPS + 6 * B_PAD * N_PAD,
            transcendentals=B_PAD * N_PAD,
            bytes_accessed=_X_BYTES + _WEIGHT_BYTES + _TGT_BYTES + 4),
    )(x, w1, b1, w2, b2, t)
    return loss[0, 0]


@partial(jax.jit, static_argnames=("mode",))
def model_forward(params_p, inputs, targets, mode):
    # targets.reshape(-1, 63)  (matches the PyTorch reshape)
    targets = targets.reshape(-1, N_OUT)
    if mode == "train":
        # Fused: MLP + wing loss in one pallas_call (no (B,63) HBM round-trip).
        # NOTE: loss is the mean over all B*63 elements; verify against the
        # reference reduction convention if it differs.
        return {"joint": total_wing_loss_fused(inputs, targets, params_p)}
    elif mode == "test":
        return backbone_net(inputs, params_p)
    # render_keypoint is unused by forward()  # TODO(synk): not part of fwd path


# ----------------------------- main -------------------------------------------
if __name__ == "__main__":
    key = jax.random.PRNGKey(0)
    k_x, k_t, k_w1, k_w2 = jax.random.split(key, 4)

    # deterministic parameter init (synthetic stand-in backbone weights)
    w1 = jax.random.normal(k_w1, (D_IN, HID), jnp.float32) * 0.02
    b1 = jnp.zeros((1, HID), jnp.float32)
    w2 = jax.random.normal(k_w2, (HID, N_OUT), jnp.float32) * 0.02
    b2 = jnp.zeros((1, N_OUT), jnp.float32)
    params_p = pad_params((w1, b1, w2, b2))     # lane-aligned bf16/f32 slabs

    inputs = jax.random.normal(k_x, (B, C, H, W), jnp.float32)   # NCHW image
    targets = jax.random.normal(k_t, (B, 21, 3), jnp.float32)    # 21 joints x 3

    # train mode: fused (jitted) kernel returns the scalar loss dict
    loss = model_forward(params_p, inputs, targets, mode="train")
    jax.block_until_ready(loss["joint"])

    # test mode: backbone output (B, 63)
    heatmap = model_forward(params_p, inputs, targets, mode="test")
    jax.block_until_ready(heatmap)

    assert heatmap.shape == (B, N_OUT)
    assert loss["joint"].shape == ()
    assert bool(jnp.isfinite(loss["joint"]))
    print("KERNEL_OK")
</pallas_src>

<mosaic_0001>
module attributes {stable_mosaic.version = 11 : i64} {
  func.func @fused_train_kernel(%arg0: memref<16x768xbf16, #tpu.memory_space<vmem>>, %arg1: memref<768x128xbf16, #tpu.memory_space<vmem>>, %arg2: memref<1x128xf32, #tpu.memory_space<vmem>>, %arg3: memref<128x128xbf16, #tpu.memory_space<vmem>>, %arg4: memref<1x128xf32, #tpu.memory_space<vmem>>, %arg5: memref<16x128xf32, #tpu.memory_space<vmem>>, %arg6: memref<1x1xf32, #tpu.memory_space<smem>>) attributes {dimension_semantics = [], scalar_prefetch = 0 : i64, scratch_operands = 0 : i64, tpu.core_type = #tpu.core_type<tc>} {
    %c0 = arith.constant 0 : index
    %c0_0 = arith.constant 0 : index
    %0 = vector.load %arg0[%c0, %c0_0] : memref<16x768xbf16, #tpu.memory_space<vmem>>, vector<16x768xbf16>
    %c0_1 = arith.constant 0 : index
    %c0_2 = arith.constant 0 : index
    %1 = vector.load %arg1[%c0_1, %c0_2] : memref<768x128xbf16, #tpu.memory_space<vmem>>, vector<768x128xbf16>
    %cst = arith.constant dense<0.000000e+00> : vector<16x128xf32>
    %2 = tpu.matmul %0, %1, %cst {dimension_numbers = #tpu.dot_dimension_numbers<[1], [0], [0], [1], [0, 0, 1, 1], [], []>} : vector<16x768xbf16>, vector<768x128xbf16>, vector<16x128xf32> -> vector<16x128xf32>
    %c0_3 = arith.constant 0 : index
    %c0_4 = arith.constant 0 : index
    %3 = vector.load %arg2[%c0_3, %c0_4] : memref<1x128xf32, #tpu.memory_space<vmem>>, vector<1x128xf32>
    %4 = vector.broadcast %3 : vector<1x128xf32> to vector<16x128xf32>
    %5 = arith.addf %2, %4 : vector<16x128xf32>
    %cst_5 = arith.constant 0.000000e+00 : f32
    %6 = vector.broadcast %cst_5 : f32 to vector<16x128xf32>
    %7 = arith.maximumf %5, %6 : vector<16x128xf32>
    %8 = arith.truncf %7 : vector<16x128xf32> to vector<16x128xbf16>
    %c0_6 = arith.constant 0 : index
    %c0_7 = arith.constant 0 : index
    %9 = vector.load %arg3[%c0_6, %c0_7] : memref<128x128xbf16, #tpu.memory_space<vmem>>, vector<128x128xbf16>
    %cst_8 = arith.constant dense<0.000000e+00> : vector<16x128xf32>
    %10 = tpu.matmul %8, %9, %cst_8 {dimension_numbers = #tpu.dot_dimension_numbers<[1], [0], [0], [1], [0, 0, 1, 1], [], []>} : vector<16x128xbf16>, vector<128x128xbf16>, vector<16x128xf32> -> vector<16x128xf32>
    %c0_9 = arith.constant 0 : index
    %c0_10 = arith.constant 0 : index
    %11 = vector.load %arg4[%c0_9, %c0_10] : memref<1x128xf32, #tpu.memory_space<vmem>>, vector<1x128xf32>
    %12 = vector.broadcast %11 : vector<1x128xf32> to vector<16x128xf32>
    %13 = arith.addf %10, %12 : vector<16x128xf32>
    %c0_11 = arith.constant 0 : index
    %c0_12 = arith.constant 0 : index
    %14 = vector.load %arg5[%c0_11, %c0_12] : memref<16x128xf32, #tpu.memory_space<vmem>>, vector<16x128xf32>
    %15 = arith.subf %13, %14 : vector<16x128xf32>
    %16 = math.absf %15 : vector<16x128xf32>
    %cst_13 = arith.constant 1.000000e+01 : f32
    %17 = vector.broadcast %cst_13 : f32 to vector<16x128xf32>
    %18 = arith.cmpf olt, %16, %17 : vector<16x128xf32>
    %cst_14 = arith.constant 2.000000e+00 : f32
    %19 = vector.broadcast %cst_14 : f32 to vector<16x128xf32>
    %20 = arith.divf %16, %19 : vector<16x128xf32>
    %cst_15 = arith.constant 1.000000e+00 : f32
    %21 = vector.broadcast %cst_15 : f32 to vector<16x128xf32>
    %22 = arith.addf %21, %20 : vector<16x128xf32>
    %23 = math.log %22 : vector<16x128xf32>
    %cst_16 = arith.constant 1.000000e+01 : f32
    %24 = vector.broadcast %cst_16 : f32 to vector<16x128xf32>
    %25 = arith.mulf %24, %23 : vector<16x128xf32>
    %cst_17 = arith.constant -7.9175949 : f32
    %26 = vector.broadcast %cst_17 : f32 to vector<16x128xf32>
    %27 = arith.subf %16, %26 : vector<16x128xf32>
    %28 = arith.select %18, %25, %27 : vector<16x128xi1>, vector<16x128xf32>
    %29 = tpu.iota {dimensions = array<i32: 0>} : vector<16x128xi32>
    %30 = tpu.iota {dimensions = array<i32: 1>} : vector<16x128xi32>
    %c2_i32 = arith.constant 2 : i32
    %31 = vector.broadcast %c2_i32 : i32 to vector<16x128xi32>
    %32 = arith.cmpi slt, %29, %31 : vector<16x128xi32>
    %c63_i32 = arith.constant 63 : i32
    %33 = vector.broadcast %c63_i32 : i32 to vector<16x128xi32>
    %34 = arith.cmpi slt, %30, %33 : vector<16x128xi32>
    %35 = arith.andi %32, %34 : vector<16x128xi1>
    %cst_18 = arith.constant 0.000000e+00 : f32
    %36 = vector.broadcast %cst_18 : f32 to vector<16x128xf32>
    %37 = arith.select %35, %28, %36 : vector<16x128xi1>, vector<16x128xf32>
    %38 = vector.shape_cast %37 : vector<16x128xf32> to vector<1x16x128xf32>
    %cst_19 = arith.constant dense<0.000000e+00> : vector<1xf32>
    %39 = vector.multi_reduction <add>, %38, %cst_19 [1, 2] : vector<1x16x128xf32> to vector<1xf32>
    %40 = vector.shape_cast %39 : vector<1xf32> to vector<1x1x1xf32>
    %41 = vector.extract %40[0, 0, 0] : f32 from vector<1x1x1xf32>
    %cst_20 = arith.constant 0.00793650839 : f32
    %42 = arith.mulf %41, %cst_20 : f32
    %c0_21 = arith.constant 0 : index
    %c0_22 = arith.constant 0 : index
    %43 = memref.load %arg6[%c0_21, %c0_22] : memref<1x1xf32, #tpu.memory_space<smem>>
    memref.store %42, %arg6[%c0_21, %c0_22] : memref<1x1xf32, #tpu.memory_space<smem>>
    return
  }
}

</mosaic_0001>

<llo_original>
// kernel: model_forward.1
$region0: #{model_forward.1}
  #allocation0 [shape = 'u32[]', space=smem, size = 0x4, offset = 0x4, fixed_abs, tag = 'smem constant byte address 0x4 - core index']
  #allocation1 [shape = 'u32[144,128]{1,0:T(1,128)}', space=vmem, size = 0x12000, scoped, tag = 'internal scratch']
  %s0 = inlined_call_operand.vmem [shape: bf16[16,768], index: 0, kind: input, shape index: {}]
  %s1 = inlined_call_operand.hbm [shape: bf16[768,128], index: 1, kind: input, shape index: {}]
  %s2 = inlined_call_operand.vmem [shape: f32[1,128], index: 2, kind: input, shape index: {}]
  %s3 = inlined_call_operand.vmem [shape: bf16[128,128], index: 3, kind: input, shape index: {}]
  %s4 = inlined_call_operand.vmem [shape: f32[1,128], index: 4, kind: input, shape index: {}]
  %s5 = inlined_call_operand.vmem [shape: f32[16,128], index: 5, kind: input, shape index: {}]
  %s6 = inlined_call_operand.hbm [shape: f32[1,1], index: 6, kind: output, shape index: {}]
  %s7 = sld [smem:[#allocation0]]
  $region38: #{model_forward.1} parent=0
    _
  %s9 = ssub.s32 1, %s7
  %s10 = scalar_select 0, %s9, %s7
  $region1: #{model_forward.1} parent=0
    #allocation2 [shape = 'u8[196608]{0}', space=vmem, size = 0x30000, scoped, tag = 'input window, operand 1, single buffered']
    #allocation3 [shape = 's32[1]{0}', space=sflag, size = 0x4, scoped, tag = 'scoped memory for model_forward.1']
    #allocation4 [shape = 's32[1]{0}', space=sflag, size = 0x4, scoped, tag = 'scoped memory for model_forward.1']
    #allocation5 [shape = 'u8[512]{0}', space=smem, size = 0x200, scoped, tag = 'output window, operand 0, single buffered']
    %11 = vsyncpa [#allocation3], 0
    %12 = vsyncpa [#allocation4], 0
    // Predicated region
    $region2: #{model_forward.1} parent=1 // pred_check
      _
    $region3: #{model_forward.1} parent=1 // pred_check_branch
      %14 = sbr.rel (0) target = $region5
    $region4: #{model_forward.1} parent=1 // pred_region
      _
    $region5: #{model_forward.1} parent=1 // pred_fallthru
      _
    // Predicated region
    $region6: #{model_forward.1} parent=1 // pred_check
      _
    $region7: #{model_forward.1} parent=1 // pred_check_branch
      %16 = sbr.rel (0) target = $region9
    $region8: #{model_forward.1} parent=1 // pred_region
      %s18 = ssub.s32 6144, 6144
      %19 = vsyncadd [#allocation3], %s18
      %s20 = sshll.u32 [#allocation2], 4
      %s21 = int_to_ptr.vmem [resolvable:$true] %s20
      %26 = dma.hbm_to_vmem [thread:$0]  %s1, 6144, %s21, [#allocation3], 64, 64, 4
    $region9: #{model_forward.1} parent=1 // pred_fallthru
      _
    // Predicated region
    $region10: #{model_forward.1} parent=1 // pred_check
      _
    $region11: #{model_forward.1} parent=1 // pred_check_branch
      %28 = sbr.rel (0) target = $region13
    $region12: #{model_forward.1} parent=1 // pred_region
      _
    $region13: #{model_forward.1} parent=1 // pred_fallthru
      _
    // Predicated region
    $region14: #{model_forward.1} parent=1 // pred_check
      _
    $region15: #{model_forward.1} parent=1 // pred_check_branch
      %30 = sbr.rel (0) target = $region17
    $region16: #{model_forward.1} parent=1 // pred_region
      _
    $region17: #{model_forward.1} parent=1 // pred_fallthru
      _
    // Predicated region
    $region18: #{model_forward.1} parent=1 // pred_check
      _
    $region19: #{model_forward.1} parent=1 // pred_check_branch
      %32 = sbr.rel (0) target = $region21
    $region20: #{model_forward.1} parent=1 // pred_region
      _
    $region21: #{model_forward.1} parent=1 // pred_fallthru
      _
    // Predicated region
    $region22: #{model_forward.1} parent=1 // pred_check
      _
    $region23: #{model_forward.1} parent=1 // pred_check_branch
      %34 = sbr.rel (0) target = $region25
    $region24: #{model_forward.1} parent=1 // pred_region
      _
    $region25: #{model_forward.1} parent=1 // pred_fallthru
      _
    // Predicated region
    $region26: #{model_forward.1} parent=1 // pred_check
      _
    $region27: #{model_forward.1} parent=1 // pred_check_branch
      %36 = sbr.rel (0) target = $region29
    $region28: #{model_forward.1} parent=1 // pred_region
      %37 = dma.done [#allocation3], 6144
    $region29: #{model_forward.1} parent=1 // pred_fallthru
      _
    %v39 = vld [vmem:[%s0] sm:$0xff]
    %v40 = vld [vmem:[%s0 + $0x8] sm:$0xff]
    %v41 = vld [vmem:[%s0 + $0x10] sm:$0xff]
    %v42 = vld [vmem:[%s0 + $0x18] sm:$0xff]
    %v43 = vld [vmem:[%s0 + $0x20] sm:$0xff]
    %v44 = vld [vmem:[%s0 + $0x28] sm:$0xff]
    %v45 = vld [vmem:[#allocation2] sm:$0xf]
    %v46 = vld [vmem:[#allocation2 + $0x4] sm:$0xf]
    %v47 = vld [vmem:[#allocation2 + $0x8] sm:$0xf]
    %v48 = vld [vmem:[#allocation2 + $0xc] sm:$0xf]
    %v49 = vld [vmem:[#allocation2 + $0x10] sm:$0xf]
    %v50 = vld [vmem:[#allocation2 + $0x14] sm:$0xf]
    %v51 = vld [vmem:[#allocation2 + $0x18] sm:$0xf]
    %v52 = vld [vmem:[#allocation2 + $0x1c] sm:$0xf]
    %v53 = vld [vmem:[#allocation2 + $0x20] sm:$0xf]
    %v54 = vld [vmem:[#allocation2 + $0x24] sm:$0xf]
    %v55 = vld [vmem:[#allocation2 + $0x28] sm:$0xf]
    %v56 = vld [vmem:[#allocation2 + $0x2c] sm:$0xf]
    %v57 = vld [vmem:[#allocation2 + $0x30] sm:$0xf]
    %v58 = vld [vmem:[#allocation2 + $0x34] sm:$0xf]
    %v59 = vld [vmem:[#allocation2 + $0x38] sm:$0xf]
    %v60 = vld [vmem:[#allocation2 + $0x3c] sm:$0xf]
    %v61 = vld [vmem:[#allocation2 + $0x40] sm:$0xf]
    %v62 = vld [vmem:[#allocation2 + $0x44] sm:$0xf]
    %v63 = vld [vmem:[#allocation2 + $0x48] sm:$0xf]
    %v64 = vld [vmem:[#allocation2 + $0x4c] sm:$0xf]
    %v65 = vld [vmem:[#allocation2 + $0x50] sm:$0xf]
    %v66 = vld [vmem:[#allocation2 + $0x54] sm:$0xf]
    %v67 = vld [vmem:[#allocation2 + $0x58] sm:$0xf]
    %v68 = vld [vmem:[#allocation2 + $0x5c] sm:$0xf]
    %v69 = vld [vmem:[#allocation2 + $0x60] sm:$0xf]
    %v70 = vld [vmem:[#allocation2 + $0x64] sm:$0xf]
    %v71 = vld [vmem:[#allocation2 + $0x68] sm:$0xf]
    %v72 = vld [vmem:[#allocation2 + $0x6c] sm:$0xf]
    %v73 = vld [vmem:[#allocation2 + $0x70] sm:$0xf]
    %v74 = vld [vmem:[#allocation2 + $0x74] sm:$0xf]
    %v75 = vld [vmem:[#allocation2 + $0x78] sm:$0xf]
    %v76 = vld [vmem:[#allocation2 + $0x7c] sm:$0xf]
    %v77 = vld [vmem:[#allocation2 + $0x80] sm:$0xf]
    %v78 = vld [vmem:[#allocation2 + $0x84] sm:$0xf]
    %v79 = vld [vmem:[#allocation2 + $0x88] sm:$0xf]
    %v80 = vld [vmem:[#allocation2 + $0x8c] sm:$0xf]
    %v81 = vld [vmem:[#allocation2 + $0x90] sm:$0xf]
    %v82 = vld [vmem:[#allocation2 + $0x94] sm:$0xf]
    %v83 = vld [vmem:[#allocation2 + $0x98] sm:$0xf]
    %v84 = vld [vmem:[#allocation2 + $0x9c] sm:$0xf]
    %v85 = vld [vmem:[#allocation2 + $0xa0] sm:$0xf]
    %v86 = vld [vmem:[#allocation2 + $0xa4] sm:$0xf]
    %v87 = vld [vmem:[#allocation2 + $0xa8] sm:$0xf]
    %v88 = vld [vmem:[#allocation2 + $0xac] sm:$0xf]
    %v89 = vld [vmem:[#allocation2 + $0xb0] sm:$0xf]
    %v90 = vld [vmem:[#allocation2 + $0xb4] sm:$0xf]
    %v91 = vld [vmem:[#allocation2 + $0xb8] sm:$0xf]
    %v92 = vld [vmem:[#allocation2 + $0xbc] sm:$0xf]
    %v93 = vld [vmem:[#allocation2 + $0xc0] sm:$0xf]
    %v94 = vld [vmem:[#allocation2 + $0xc4] sm:$0xf]
    %v95 = vld [vmem:[#allocation2 + $0xc8] sm:$0xf]
    %v96 = vld [vmem:[#allocation2 + $0xcc] sm:$0xf]
    %v97 = vld [vmem:[#allocation2 + $0xd0] sm:$0xf]
    %v98 = vld [vmem:[#allocation2 + $0xd4] sm:$0xf]
    %v99 = vld [vmem:[#allocation2 + $0xd8] sm:$0xf]
    %v100 = vld [vmem:[#allocation2 + $0xdc] sm:$0xf]
    %v101 = vld [vmem:[#allocation2 + $0xe0] sm:$0xf]
    %v102 = vld [vmem:[#allocation2 + $0xe4] sm:$0xf]
    %v103 = vld [vmem:[#allocation2 + $0xe8] sm:$0xf]
    %v104 = vld [vmem:[#allocation2 + $0xec] sm:$0xf]
    %v105 = vld [vmem:[#allocation2 + $0xf0] sm:$0xf]
    %v106 = vld [vmem:[#allocation2 + $0xf4] sm:$0xf]
    %v107 = vld [vmem:[#allocation2 + $0xf8] sm:$0xf]
    %v108 = vld [vmem:[#allocation2 + $0xfc] sm:$0xf]
    %v109 = vld [vmem:[#allocation2 + $0x100] sm:$0xf]
    %v110 = vld [vmem:[#allocation2 + $0x104] sm:$0xf]
    %v111 = vld [vmem:[#allocation2 + $0x108] sm:$0xf]
    %v112 = vld [vmem:[#allocation2 + $0x10c] sm:$0xf]
    %v113 = vld [vmem:[#allocation2 + $0x110] sm:$0xf]
    %v114 = vld [vmem:[#allocation2 + $0x114] sm:$0xf]
    %v115 = vld [vmem:[#allocation2 + $0x118] sm:$0xf]
    %v116 = vld [vmem:[#allocation2 + $0x11c] sm:$0xf]
    %v117 = vld [vmem:[#allocation2 + $0x120] sm:$0xf]
    %v118 = vld [vmem:[#allocation2 + $0x124] sm:$0xf]
    %v119 = vld [vmem:[#allocation2 + $0x128] sm:$0xf]
    %v120 = vld [vmem:[#allocation2 + $0x12c] sm:$0xf]
    %v121 = vld [vmem:[#allocation2 + $0x130] sm:$0xf]
    %v122 = vld [vmem:[#allocation2 + $0x134] sm:$0xf]
    %v123 = vld [vmem:[#allocation2 + $0x138] sm:$0xf]
    %v124 = vld [vmem:[#allocation2 + $0x13c] sm:$0xf]
    %v125 = vld [vmem:[#allocation2 + $0x140] sm:$0xf]
    %v126 = vld [vmem:[#allocation2 + $0x144] sm:$0xf]
    %v127 = vld [vmem:[#allocation2 + $0x148] sm:$0xf]
    %v128 = vld [vmem:[#allocation2 + $0x14c] sm:$0xf]
    %v129 = vld [vmem:[#allocation2 + $0x150] sm:$0xf]
    %v130 = vld [vmem:[#allocation2 + $0x154] sm:$0xf]
    %v131 = vld [vmem:[#allocation2 + $0x158] sm:$0xf]
    %v132 = vld [vmem:[#allocation2 + $0x15c] sm:$0xf]
    %v133 = vld [vmem:[#allocation2 + $0x160] sm:$0xf]
    %v134 = vld [vmem:[#allocation2 + $0x164] sm:$0xf]
    %v135 = vld [vmem:[#allocation2 + $0x168] sm:$0xf]
    %v136 = vld [vmem:[#allocation2 + $0x16c] sm:$0xf]
    %v137 = vld [vmem:[#allocation2 + $0x170] sm:$0xf]
    %v138 = vld [vmem:[#allocation2 + $0x174] sm:$0xf]
    %v139 = vld [vmem:[#allocation2 + $0x178] sm:$0xf]
    %v140 = vld [vmem:[#allocation2 + $0x17c] sm:$0xf]
    %v141 = vld [vmem:[%s2] sm:$0x1]
    %v143 = vlaneseq
    %v144 = vshrl.u32 %v143, 7
    %v145 = vsub.s32 0, %v144
    %v146 = vrot.slane %v141, %v145
    %v154 = vunpack.c.l.b16 %v39
    %v155 = vunpack.c.h.b16 %v39
    %v156 = vunpack.c.l.b16 %v40
    %v157 = vunpack.c.h.b16 %v40
    %v158 = vunpack.c.l.b16 %v41
    %v159 = vunpack.c.h.b16 %v41
    %v160 = vunpack.c.l.b16 %v42
    %v161 = vunpack.c.h.b16 %v42
    %v162 = vunpack.c.l.b16 %v43
    %v163 = vunpack.c.h.b16 %v43
    %v164 = vunpack.c.l.b16 %v44
    %v165 = vunpack.c.h.b16 %v44
    %v166 = vpack.c.b16 %v160, %v154
    %v167 = vpack.c.b16 %v161, %v155
    %v168 = vpack.c.b16 %v162, %v156
    %v169 = vpack.c.b16 %v163, %v157
    %v170 = vpack.c.b16 %v164, %v158
    %v171 = vpack.c.b16 %v165, %v159
    %v274 = vunpack.c.l.b16 %v45
    %v275 = vunpack.c.l.b16 %v46
    %v276 = vunpack.c.l.b16 %v47
    %v277 = vunpack.c.l.b16 %v48
    %v278 = vunpack.c.l.b16 %v49
    %v279 = vunpack.c.l.b16 %v50
    %v280 = vunpack.c.l.b16 %v51
    %v281 = vunpack.c.l.b16 %v52
    %v282 = vunpack.c.l.b16 %v53
    %v283 = vunpack.c.l.b16 %v54
    %v284 = vunpack.c.l.b16 %v55
    %v285 = vunpack.c.l.b16 %v56
    %v286 = vunpack.c.l.b16 %v57
    %v287 = vunpack.c.l.b16 %v58
    %v288 = vunpack.c.l.b16 %v59
    %v289 = vunpack.c.l.b16 %v60
    %v290 = vunpack.c.l.b16 %v61
    %v291 = vunpack.c.l.b16 %v62
    %v292 = vunpack.c.l.b16 %v63
    %v293 = vunpack.c.l.b16 %v64
    %v294 = vunpack.c.l.b16 %v65
    %v295 = vunpack.c.l.b16 %v66
    %v296 = vunpack.c.l.b16 %v67
    %v297 = vunpack.c.l.b16 %v68
    %v298 = vunpack.c.l.b16 %v69
    %v299 = vunpack.c.l.b16 %v70
    %v300 = vunpack.c.l.b16 %v71
    %v301 = vunpack.c.l.b16 %v72
    %v302 = vunpack.c.l.b16 %v73
    %v303 = vunpack.c.l.b16 %v74
    %v304 = vunpack.c.l.b16 %v75
    %v305 = vunpack.c.l.b16 %v76
    %v306 = vunpack.c.l.b16 %v77
    %v307 = vunpack.c.l.b16 %v78
    %v308 = vunpack.c.l.b16 %v79
    %v309 = vunpack.c.l.b16 %v80
    %v310 = vunpack.c.l.b16 %v81
    %v311 = vunpack.c.l.b16 %v82
    %v312 = vunpack.c.l.b16 %v83
    %v313 = vunpack.c.l.b16 %v84
    %v314 = vunpack.c.l.b16 %v85
    %v315 = vunpack.c.l.b16 %v86
    %v316 = vunpack.c.l.b16 %v87
    %v317 = vunpack.c.l.b16 %v88
    %v318 = vunpack.c.l.b16 %v89
    %v319 = vunpack.c.l.b16 %v90
    %v320 = vunpack.c.l.b16 %v91
    %v321 = vunpack.c.l.b16 %v92
    %v322 = vunpack.c.l.b16 %v93
    %v323 = vunpack.c.l.b16 %v94
    %v324 = vunpack.c.l.b16 %v95
    %v325 = vunpack.c.l.b16 %v96
    %v326 = vunpack.c.l.b16 %v97
    %v327 = vunpack.c.l.b16 %v98
    %v328 = vunpack.c.l.b16 %v99
    %v329 = vunpack.c.l.b16 %v100
    %v330 = vunpack.c.l.b16 %v101
    %v331 = vunpack.c.l.b16 %v102
    %v332 = vunpack.c.l.b16 %v103
    %v333 = vunpack.c.l.b16 %v104
    %v334 = vunpack.c.l.b16 %v105
    %v335 = vunpack.c.l.b16 %v106
    %v336 = vunpack.c.l.b16 %v107
    %v337 = vunpack.c.l.b16 %v108
    %v338 = vunpack.c.l.b16 %v109
    %v339 = vunpack.c.l.b16 %v110
    %v340 = vunpack.c.l.b16 %v111
    %v341 = vunpack.c.l.b16 %v112
    %v342 = vunpack.c.l.b16 %v113
    %v343 = vunpack.c.l.b16 %v114
    %v344 = vunpack.c.l.b16 %v115
    %v345 = vunpack.c.l.b16 %v116
    %v346 = vunpack.c.l.b16 %v117
    %v347 = vunpack.c.l.b16 %v118
    %v348 = vunpack.c.l.b16 %v119
    %v349 = vunpack.c.l.b16 %v120
    %v350 = vunpack.c.l.b16 %v121
    %v351 = vunpack.c.l.b16 %v122
    %v352 = vunpack.c.l.b16 %v123
    %v353 = vunpack.c.l.b16 %v124
    %v354 = vunpack.c.l.b16 %v125
    %v355 = vunpack.c.l.b16 %v126
    %v356 = vunpack.c.l.b16 %v127
    %v357 = vunpack.c.l.b16 %v128
    %v358 = vunpack.c.l.b16 %v129
    %v359 = vunpack.c.l.b16 %v130
    %v360 = vunpack.c.l.b16 %v131
    %v361 = vunpack.c.l.b16 %v132
    %v362 = vunpack.c.l.b16 %v133
    %v363 = vunpack.c.l.b16 %v134
    %v364 = vunpack.c.l.b16 %v135
    %v365 = vunpack.c.l.b16 %v136
    %v366 = vunpack.c.l.b16 %v137
    %v367 = vunpack.c.l.b16 %v138
    %v368 = vunpack.c.l.b16 %v139
    %v369 = vunpack.c.l.b16 %v140
    %v370 = vpack.c.b16 %v275, %v274
    %v371 = vpack.c.b16 %v277, %v276
    %v372 = vpack.c.b16 %v279, %v278
    %v373 = vpack.c.b16 %v281, %v280
    %v374 = vpack.c.b16 %v283, %v282
    %v375 = vpack.c.b16 %v285, %v284
    %v376 = vpack.c.b16 %v287, %v286
    %v377 = vpack.c.b16 %v289, %v288
    %v378 = vpack.c.b16 %v291, %v290
    %v379 = vpack.c.b16 %v293, %v292
    %v380 = vpack.c.b16 %v295, %v294
    %v381 = vpack.c.b16 %v297, %v296
    %v382 = vpack.c.b16 %v299, %v298
    %v383 = vpack.c.b16 %v301, %v300
    %v384 = vpack.c.b16 %v303, %v302
    %v385 = vpack.c.b16 %v305, %v304
    %v386 = vpack.c.b16 %v307, %v306
    %v387 = vpack.c.b16 %v309, %v308
    %v388 = vpack.c.b16 %v311, %v310
    %v389 = vpack.c.b16 %v313, %v312
    %v390 = vpack.c.b16 %v315, %v314
    %v391 = vpack.c.b16 %v317, %v316
    %v392 = vpack.c.b16 %v319, %v318
    %v393 = vpack.c.b16 %v321, %v320
    %v394 = vpack.c.b16 %v323, %v322
    %v395 = vpack.c.b16 %v325, %v324
    %v396 = vpack.c.b16 %v327, %v326
    %v397 = vpack.c.b16 %v329, %v328
    %v398 = vpack.c.b16 %v331, %v330
    %v399 = vpack.c.b16 %v333, %v332
    %v400 = vpack.c.b16 %v335, %v334
    %v401 = vpack.c.b16 %v337, %v336
    %v402 = vpack.c.b16 %v339, %v338
    %v403 = vpack.c.b16 %v341, %v340
    %v404 = vpack.c.b16 %v343, %v342
    %v405 = vpack.c.b16 %v345, %v344
    %v406 = vpack.c.b16 %v347, %v346
    %v407 = vpack.c.b16 %v349, %v348
    %v408 = vpack.c.b16 %v351, %v350
    %v409 = vpack.c.b16 %v353, %v352
    %v410 = vpack.c.b16 %v355, %v354
    %v411 = vpack.c.b16 %v357, %v356
    %v412 = vpack.c.b16 %v359, %v358
    %v413 = vpack.c.b16 %v361, %v360
    %v414 = vpack.c.b16 %v363, %v362
    %v415 = vpack.c.b16 %v365, %v364
    %v416 = vpack.c.b16 %v367, %v366
    %v417 = vpack.c.b16 %v369, %v368
    %466 = vmatprep.subr.bf16.mxu0 0
    %467 = vmatpush1.bf16.msra.mxu0 %v370
    %468 = vmatprep.subr.bf16.mxu0 0
    %469 = vmatpush1.bf16.msra.mxu0 %v371
    %470 = vmatprep.subr.bf16.mxu0 0
    %471 = vmatpush1.bf16.msra.mxu0 %v372
    %472 = vmatprep.subr.bf16.mxu0 0
    %473 = vmatpush1.bf16.msra.mxu0 %v373
    %474 = vmatprep.subr.bf16.mxu0 0
    %475 = vmatpush1.bf16.msra.mxu0 %v374
    %476 = vmatprep.subr.bf16.mxu0 0
    %477 = vmatpush1.bf16.msra.mxu0 %v375
    %478 = vmatprep.subr.bf16.mxu0 0
    %479 = vmatpush1.bf16.msra.mxu0 %v376
    %480 = vmatprep.subr.bf16.mxu0 0
    %481 = vmatpush1.bf16.msra.mxu0 %v377
    %482 = vmatprep.subr.bf16.mxu0 0
    %483 = vmatpush1.bf16.msra.mxu0 %v378
    %484 = vmatprep.subr.bf16.mxu0 0
    %485 = vmatpush1.bf16.msra.mxu0 %v379
    %486 = vmatprep.subr.bf16.mxu0 0
    %487 = vmatpush1.bf16.msra.mxu0 %v380
    %488 = vmatprep.subr.bf16.mxu0 0
    %489 = vmatpush1.bf16.msra.mxu0 %v381
    %490 = vmatprep.subr.bf16.mxu0 0
    %491 = vmatpush1.bf16.msra.mxu0 %v382
    %492 = vmatprep.subr.bf16.mxu0 0
    %493 = vmatpush1.bf16.msra.mxu0 %v383
    %494 = vmatprep.subr.bf16.mxu0 0
    %495 = vmatpush1.bf16.msra.mxu0 %v384
    %496 = vmatprep.subr.bf16.mxu0 0
    %497 = vmatpush1.bf16.msra.mxu0 %v385
    %498 = vmatprep.mubr.bf16.mxu0 %v167
    %499 = vmatmul.mubr.bf16.gmra.mrb[0].mxu0 %v166
    %v500 = vpop.f32.mrb[0].mxu0
    %v501 = vadd.f32 %v146, %v500
    %v502 = vpop.f32.mrb[0].mxu0
    %v503 = vpop.f32.mrb[0].mxu0
    %v504 = vadd.f32 %v146, %v503
    %v505 = vpop.f32.mrb[0].mxu0
    %506 = vdwg.mxu0
    %507 = vmatprep.subr.bf16.mxu0 0
    %508 = vmatpush1.bf16.msra.mxu0 %v386
    %509 = vmatprep.subr.bf16.mxu0 0
    %510 = vmatpush1.bf16.msra.mxu0 %v387
    %511 = vmatprep.subr.bf16.mxu0 0
    %512 = vmatpush1.bf16.msra.mxu0 %v388
    %513 = vmatprep.subr.bf16.mxu0 0
    %514 = vmatpush1.bf16.msra.mxu0 %v389
    %515 = vmatprep.subr.bf16.mxu0 0
    %516 = vmatpush1.bf16.msra.mxu0 %v390
    %517 = vmatprep.subr.bf16.mxu0 0
    %518 = vmatpush1.bf16.msra.mxu0 %v391
    %519 = vmatprep.subr.bf16.mxu0 0
    %520 = vmatpush1.bf16.msra.mxu0 %v392
    %521 = vmatprep.subr.bf16.mxu0 0
    %522 = vmatpush1.bf16.msra.mxu0 %v393
    %523 = vmatprep.subr.bf16.mxu0 0
    %524 = vmatpush1.bf16.msra.mxu0 %v394
    %525 = vmatprep.subr.bf16.mxu0 0
    %526 = vmatpush1.bf16.msra.mxu0 %v395
    %527 = vmatprep.subr.bf16.mxu0 0
    %528 = vmatpush1.bf16.msra.mxu0 %v396
    %529 = vmatprep.subr.bf16.mxu0 0
    %530 = vmatpush1.bf16.msra.mxu0 %v397
    %531 = vmatprep.subr.bf16.mxu0 0
    %532 = vmatpush1.bf16.msra.mxu0 %v398
    %533 = vmatprep.subr.bf16.mxu0 0
    %534 = vmatpush1.bf16.msra.mxu0 %v399
    %535 = vmatprep.subr.bf16.mxu0 0
    %536 = vmatpush1.bf16.msra.mxu0 %v400
    %537 = vmatprep.subr.bf16.mxu0 0
    %538 = vmatpush1.bf16.msra.mxu0 %v401
    %539 = vmatprep.mubr.bf16.mxu0 %v169
    %540 = vmatmul.mubr.bf16.gmra.mrb[0].mxu0 %v168
    %v541 = vpop.f32.mrb[0].mxu0
    %v542 = vadd.f32 %v501, %v541
    %v543 = vpop.f32.mrb[0].mxu0
    %v544 = vpop.f32.mrb[0].mxu0
    %v545 = vadd.f32 %v504, %v544
    %v546 = vpop.f32.mrb[0].mxu0
    %547 = vdwg.mxu0
    %548 = vmatprep.subr.bf16.mxu0 0
    %549 = vmatpush1.bf16.msra.mxu0 %v402
    %550 = vmatprep.subr.bf16.mxu0 0
    %551 = vmatpush1.bf16.msra.mxu0 %v403
    %552 = vmatprep.subr.bf16.mxu0 0
    %553 = vmatpush1.bf16.msra.mxu0 %v404
    %554 = vmatprep.subr.bf16.mxu0 0
    %555 = vmatpush1.bf16.msra.mxu0 %v405
    %556 = vmatprep.subr.bf16.mxu0 0
    %557 = vmatpush1.bf16.msra.mxu0 %v406
    %558 = vmatprep.subr.bf16.mxu0 0
    %559 = vmatpush1.bf16.msra.mxu0 %v407
    %560 = vmatprep.subr.bf16.mxu0 0
    %561 = vmatpush1.bf16.msra.mxu0 %v408
    %562 = vmatprep.subr.bf16.mxu0 0
    %563 = vmatpush1.bf16.msra.mxu0 %v409
    %564 = vmatprep.subr.bf16.mxu0 0
    %565 = vmatpush1.bf16.msra.mxu0 %v410
    %566 = vmatprep.subr.bf16.mxu0 0
    %567 = vmatpush1.bf16.msra.mxu0 %v411
    %568 = vmatprep.subr.bf16.mxu0 0
    %569 = vmatpush1.bf16.msra.mxu0 %v412
    %570 = vmatprep.subr.bf16.mxu0 0
    %571 = vmatpush1.bf16.msra.mxu0 %v413
    %572 = vmatprep.subr.bf16.mxu0 0
    %573 = vmatpush1.bf16.msra.mxu0 %v414
    %574 = vmatprep.subr.bf16.mxu0 0
    %575 = vmatpush1.bf16.msra.mxu0 %v415
    %576 = vmatprep.subr.bf16.mxu0 0
    %577 = vmatpush1.bf16.msra.mxu0 %v416
    %578 = vmatprep.subr.bf16.mxu0 0
    %579 = vmatpush1.bf16.msra.mxu0 %v417
    %580 = vmatprep.mubr.bf16.mxu0 %v171
    %581 = vmatmul.mubr.bf16.gmra.mrb[0].mxu0 %v170
    %v582 = vpop.f32.mrb[0].mxu0
    %v583 = vadd.f32 %v542, %v582
    %v584 = vpop.f32.mrb[0].mxu0
    %v585 = vpop.f32.mrb[0].mxu0
    %v586 = vadd.f32 %v545, %v585
    %v587 = vpop.f32.mrb[0].mxu0
    %588 = vdwg.mxu0
    %v589 = vmax.f32 %v583, 0.0
    %v590 = vmax.f32 %v586, 0.0
    %v591 = vpack.c.bf16 %v590, %v589
    %v592 = vld [vmem:[%s3] sm:$0xf]
    %v593 = vld [vmem:[%s3 + $0x4] sm:$0xf]
    %v594 = vld [vmem:[%s3 + $0x8] sm:$0xf]
    %v595 = vld [vmem:[%s3 + $0xc] sm:$0xf]
    %v596 = vld [vmem:[%s3 + $0x10] sm:$0xf]
    %v597 = vld [vmem:[%s3 + $0x14] sm:$0xf]
    %v598 = vld [vmem:[%s3 + $0x18] sm:$0xf]
    %v599 = vld [vmem:[%s3 + $0x1c] sm:$0xf]
    %v600 = vld [vmem:[%s3 + $0x20] sm:$0xf]
    %v601 = vld [vmem:[%s3 + $0x24] sm:$0xf]
    %v602 = vld [vmem:[%s3 + $0x28] sm:$0xf]
    %v603 = vld [vmem:[%s3 + $0x2c] sm:$0xf]
    %v604 = vld [vmem:[%s3 + $0x30] sm:$0xf]
    %v605 = vld [vmem:[%s3 + $0x34] sm:$0xf]
    %v606 = vld [vmem:[%s3 + $0x38] sm:$0xf]
    %v607 = vld [vmem:[%s3 + $0x3c] sm:$0xf]
    %v608 = vld [vmem:[%s4] sm:$0x1]
    %v610 = vlaneseq
    %v611 = vshrl.u32 %v610, 7
    %v612 = vsub.s32 0, %v611
    %v613 = vrot.slane %v608, %v612
    %v631 = vunpack.c.l.b16 %v592
    %v632 = vunpack.c.l.b16 %v593
    %v633 = vunpack.c.l.b16 %v594
    %v634 = vunpack.c.l.b16 %v595
    %v635 = vunpack.c.l.b16 %v596
    %v636 = vunpack.c.l.b16 %v597
    %v637 = vunpack.c.l.b16 %v598
    %v638 = vunpack.c.l.b16 %v599
    %v639 = vunpack.c.l.b16 %v600
    %v640 = vunpack.c.l.b16 %v601
    %v641 = vunpack.c.l.b16 %v602
    %v642 = vunpack.c.l.b16 %v603
    %v643 = vunpack.c.l.b16 %v604
    %v644 = vunpack.c.l.b16 %v605
    %v645 = vunpack.c.l.b16 %v606
    %v646 = vunpack.c.l.b16 %v607
    %v647 = vpack.c.b16 %v632, %v631
    %v648 = vpack.c.b16 %v634, %v633
    %v649 = vpack.c.b16 %v636, %v635
    %v650 = vpack.c.b16 %v638, %v637
    %v651 = vpack.c.b16 %v640, %v639
    %v652 = vpack.c.b16 %v642, %v641
    %v653 = vpack.c.b16 %v644, %v643
    %v654 = vpack.c.b16 %v646, %v645
    %663 = vmatprep.subr.bf16.mxu0 0
    %664 = vmatpush1.bf16.msra.mxu0 %v647
    %665 = vmatprep.subr.bf16.mxu0 0
    %666 = vmatpush1.bf16.msra.mxu0 %v648
    %667 = vmatprep.subr.bf16.mxu0 0
    %668 = vmatpush1.bf16.msra.mxu0 %v649
    %669 = vmatprep.subr.bf16.mxu0 0
    %670 = vmatpush1.bf16.msra.mxu0 %v650
    %671 = vmatprep.subr.bf16.mxu0 0
    %672 = vmatpush1.bf16.msra.mxu0 %v651
    %673 = vmatprep.subr.bf16.mxu0 0
    %674 = vmatpush1.bf16.msra.mxu0 %v652
    %675 = vmatprep.subr.bf16.mxu0 0
    %676 = vmatpush1.bf16.msra.mxu0 %v653
    %677 = vmatprep.subr.bf16.mxu0 0
    %678 = vmatpush1.bf16.msra.mxu0 %v654
    %679 = vmatprep.subr.bf16.mxu0 0
    %680 = vmatpush1.bf16.msra.mxu0 0
    %681 = vmatprep.subr.bf16.mxu0 0
    %682 = vmatpush1.bf16.msra.mxu0 0
    %683 = vmatprep.subr.bf16.mxu0 0
    %684 = vmatpush1.bf16.msra.mxu0 0
    %685 = vmatprep.subr.bf16.mxu0 0
    %686 = vmatpush1.bf16.msra.mxu0 0
    %687 = vmatprep.subr.bf16.mxu0 0
    %688 = vmatpush1.bf16.msra.mxu0 0
    %689 = vmatprep.subr.bf16.mxu0 0
    %690 = vmatpush1.bf16.msra.mxu0 0
    %691 = vmatprep.subr.bf16.mxu0 0
    %692 = vmatpush1.bf16.msra.mxu0 0
    %693 = vmatprep.subr.bf16.mxu0 0
    %694 = vmatpush1.bf16.msra.mxu0 0
    %695 = vmatprep.mubr.bf16.mxu0 0
    %696 = vmatmul.mubr.bf16.gmra.mrb[0].mxu0 %v591
    %v697 = vpop.f32.mrb[0].mxu0
    %v698 = vadd.f32 %v613, %v697
    %v699 = vpop.f32.mrb[0].mxu0
    %v700 = vpop.f32.mrb[0].mxu0
    %v701 = vadd.f32 %v613, %v700
    %v702 = vpop.f32.mrb[0].mxu0
    %703 = vdwg.mxu0
    %v704 = vld [vmem:[%s5] sm:$0xff]
    %v705 = vld [vmem:[%s5 + $0x8] sm:$0xff]
    %v706 = vsub.f32 %v698, %v704
    %v707 = vsub.f32 %v701, %v705
    %v708 = vand.u32 2147483647, %v706
    %v709 = vand.u32 2147483647, %v707
    %vm710 = vcmp.lt.f32.partialorder %v708, 10.0
    %vm711 = vcmp.lt.f32.partialorder %v709, 10.0
    %v712 = vrcp.pop 2.0
    %v713 = vmul.f32 %v708, %v712
    %v714 = vmul.f32 %v709, %v712
    %v715 = vadd.f32 %v713, 1.0
    %v716 = vadd.f32 %v714, 1.0
    %v717 = vlog2.pop %v715
    %v718 = vmul.f32 %v717, 0.6931472
    %v719 = vlog2.pop %v716
    %v720 = vmul.f32 %v719, 0.6931472
    %v721 = vmul.f32 %v718, 10.0
    %v722 = vmul.f32 %v720, 10.0
    %v723 = vsub.f32 %v708, -7.917595
    %v724 = vsub.f32 %v709, -7.917595
    %v725 = vsel %vm710, %v721, %v723
    %v726 = vsel %vm711, %v722, %v724
    %v727 = vlaneseq
    %v728 = vshrl.u32 %v727, 7
    %v729 = vadd.s32 %v728, 8
    %v730 = vlaneseq
    %v731 = vand.u32 %v730, 127
    %vm732 = vcmp.lt.s32.totalorder %v728, 2
    %vm733 = vcmp.lt.s32.totalorder %v729, 2
    %vm734 = vcmp.lt.s32.totalorder %v731, 63
    %vm735 = vmand %vm732, %vm734
    %vm736 = vmand %vm733, %vm734
    %v737 = vsel %vm735, %v725, 0.0
    %v738 = vsel %vm736, %v726, 0.0
    %v739 = vadd.f32 %v737, %v738
    %740 = vadd.xlane.f32.xlu0 %v739
    %v741 = vpop.xlane.xlu0 %740
    %v742 = vrot.slane %v741, 4
    %v743 = vadd.f32 %v741, %v742
    %v744 = vrot.slane %v743, 2
    %v745 = vadd.f32 %v743, %v744
    %v746 = vrot.slane %v745, 1
    %v747 = vadd.f32 %v745, %v746
    %s748 = vtos %v747
    %s749 = smul.f32 %s748, 0.007936508
    %s750 = scalar_lea.smem [#allocation5], 0
    %751 = sst [smem:[%s750]] %s749
    // Predicated region
    $region30: #{model_forward.1} parent=1 // pred_check
      _
    $region31: #{model_forward.1} parent=1 // pred_check_branch
      %753 = sbr.rel (0) target = $region33
    $region32: #{model_forward.1} parent=1 // pred_region
      %s755 = ssub.s32 16, 16
      %756 = vsyncadd [#allocation4], %s755
      %759 = dma.smem_to_hbm [#allocation5], 16, %s6, [#allocation4]
    $region33: #{model_forward.1} parent=1 // pred_fallthru
      _
    // Predicated region
    $region34: #{model_forward.1} parent=1 // pred_check
      _
    $region35: #{model_forward.1} parent=1 // pred_check_branch
      %761 = sbr.rel (0) target = $region37
    $region36: #{model_forward.1} parent=1 // pred_region
      %762 = dma.done [#allocation4], 16
    $region37: #{model_forward.1} parent=1 // pred_fallthru
      _
    %763 = sfence
    %764 = vsyncpa [#allocation3], 1
    %765 = vsyncpa [#allocation4], 1

</llo_original>
